<compile_context>
chip_gen: v7x
topology: tpu7x:2x2x1
jax: 0.10.0
libtpu: 0.0.40
codegen_flags: <defaults>
</compile_context>

<pallas_src>
import functools

import jax
import jax.numpy as jnp
from jax.experimental import pallas as pl
from jax.experimental.pallas import tpu as pltpu

_NEG_INF = -1e30  # plain Python float -> stays a jaxpr literal (no captured f32[])


def _attn_head_kernel(x_ref, wq_ref, wk_ref, wv_ref, o_ref, k_scr, v_scr, *,
                      tq, scale, mxu_dtype):
    # x_ref : (tq, E)   current query tile of the (padded) sequence
    # w*_ref: (E, Hp)   projection weights (resident, single-buffered)
    # o_ref : (tq, Hp)  output tile
    # k_scr/v_scr: (Tp, Hp) per-batch K/V caches, filled incrementally: rows of
    #   tile qi are projected at grid step qi and reused by all later tiles.
    qi = pl.program_id(1)
    hp = o_ref.shape[-1]
    q_start = pl.multiple_of(qi * tq, tq)

    x_tile = x_ref[...].astype(mxu_dtype)                        # (tq, E)

    # --- incremental K/V projection (only this tile's rows) ---
    k_scr[pl.ds(q_start, tq), :] = jnp.dot(
        x_tile, wk_ref[...], preferred_element_type=jnp.float32).astype(k_scr.dtype)
    v_scr[pl.ds(q_start, tq), :] = jnp.dot(
        x_tile, wv_ref[...], preferred_element_type=jnp.float32).astype(v_scr.dtype)

    # --- Q projection; 1/sqrt(d_head) folded into q (tq*Hp) not scores (tq*T) ---
    q = (jnp.dot(x_tile, wq_ref[...], preferred_element_type=jnp.float32)
         * scale).astype(mxu_dtype)                              # (tq, Hp)

    # --- flash-style causal attention: keys bounded to tiles 0..qi ---
    m0 = jnp.full((tq, 1), _NEG_INF, dtype=jnp.float32)
    l0 = jnp.zeros((tq, 1), dtype=jnp.float32)
    a0 = jnp.zeros((tq, hp), dtype=jnp.float32)

    def _step(kt, carry, *, masked):
        m_p, l_p, acc_p = carry
        k_start = pl.multiple_of(kt * tq, tq)
        k_blk = k_scr[pl.ds(k_start, tq), :]                     # (tq, Hp)
        v_blk = v_scr[pl.ds(k_start, tq), :]                     # (tq, Hp)
        s = jax.lax.dot_general(q, k_blk, (((1,), (1,)), ((), ())),
                                preferred_element_type=jnp.float32)   # (tq, tq)
        if masked:  # only the diagonal tile pays for the causal compare/select
            row = jax.lax.broadcasted_iota(jnp.int32, (tq, tq), 0)
            col = jax.lax.broadcasted_iota(jnp.int32, (tq, tq), 1)
            s = jnp.where(col <= row, s, _NEG_INF)
        m_c = jnp.maximum(m_p, jnp.max(s, axis=-1, keepdims=True))
        alpha = jnp.exp(m_p - m_c)                               # softmax math in f32
        p = jnp.exp(s - m_c)
        l_c = alpha * l_p + jnp.sum(p, axis=-1, keepdims=True)
        acc_c = alpha * acc_p + jnp.dot(p.astype(mxu_dtype), v_blk,
                                        preferred_element_type=jnp.float32)
        return m_c, l_c, acc_c

    # strictly-below-diagonal key tiles: no mask work, dynamic trip count = qi
    carry = jax.lax.fori_loop(0, qi, functools.partial(_step, masked=False),
                              (m0, l0, a0))
    # diagonal key tile: in-tile causal mask (also hides any padded tail keys)
    _, l, acc = _step(qi, carry, masked=True)

    # dropout on attention weights is identity in eval mode
    o_ref[...] = (acc * pl.reciprocal(l, approx=True)).astype(o_ref.dtype)


def _default_vmem_limit():
    cap = 128 * 1024 * 1024
    try:  # generation-aware: ~55% of physical VMEM, capped at 64 MiB
        cap = int(pltpu.get_tpu_info().vmem_capacity_bytes)
    except Exception:  # e.g. interpret mode / no TPU visible at trace time
        pass
    return min(64 * 1024 * 1024, int(cap * 0.55))


def attention_head(x, wq, wk, wv, *, tq=256, mxu_bf16=True, vmem_limit_bytes=None):
    """x: (B, T, E); wq/wk/wv: (E, H) (transpose of PyTorch's (H, E) weight)."""
    B, T, E = x.shape
    E2, H = wq.shape
    assert E2 == E, "weight/input embed-dim mismatch"
    scale = float(H) ** -0.5  # uses the REAL d_head, never a padded one

    mxu_dtype = jnp.bfloat16 if (mxu_bf16 or x.dtype == jnp.bfloat16) else x.dtype
    wq = wq.astype(mxu_dtype)
    wk = wk.astype(mxu_dtype)
    wv = wv.astype(mxu_dtype)

    # Lane-pad the head dim only when it already spans >=1 full vreg of lanes;
    # for small heads (e.g. 16/64) padding to 128 multiplies output HBM traffic.
    # TODO(synk): fuse multiple heads into the lane dimension for small d_head.
    if H >= 128 and H % 128 != 0:
        Hp = -(-H // 128) * 128
        pad = [(0, 0), (0, Hp - H)]
        wq, wk, wv = jnp.pad(wq, pad), jnp.pad(wk, pad), jnp.pad(wv, pad)
    else:
        Hp = H

    # Query tiling; pad T so it divides evenly.  Padded keys sit above the causal
    # diagonal of every real query row, padded query rows are sliced off below.
    if T <= tq:
        tq_eff, Tp = T, T
    else:
        tq_eff = tq
        Tp = -(-T // tq_eff) * tq_eff
    if Tp != T:
        x = jnp.pad(x, [(0, 0), (0, Tp - T), (0, 0)])
    num_q = Tp // tq_eff

    if vmem_limit_bytes is None:
        vmem_limit_bytes = _default_vmem_limit()

    kernel = functools.partial(_attn_head_kernel, tq=tq_eff, scale=scale,
                               mxu_dtype=mxu_dtype)

    w_itemsize = jnp.dtype(mxu_dtype).itemsize
    flops = int(B * (6 * Tp * E * Hp + 2 * Tp * Tp * Hp))   # causal: ~T^2*H per matmul
    bytes_accessed = int(x.size * x.dtype.itemsize
                         + 3 * E * Hp * w_itemsize
                         + B * Tp * Hp * x.dtype.itemsize)

    wspec = lambda: pl.BlockSpec((E, Hp), lambda b, qi: (0, 0),
                                 pipeline_mode=pl.Buffered(buffer_count=1))

    out = pl.pallas_call(
        kernel,
        out_shape=jax.ShapeDtypeStruct((B, Tp, Hp), x.dtype),
        grid_spec=pltpu.PrefetchScalarGridSpec(
            num_scalar_prefetch=0,
            grid=(B, num_q),
            in_specs=[
                # stream one query tile of x per grid step (residency O(tq*E))
                pl.BlockSpec((None, tq_eff, E), lambda b, qi: (b, qi, 0)),
                wspec(),   # Wq
                wspec(),   # Wk
                wspec(),   # Wv
            ],
            out_specs=pl.BlockSpec((None, tq_eff, Hp), lambda b, qi: (b, qi, 0)),
            scratch_shapes=[
                pltpu.VMEM((Tp, Hp), mxu_dtype),   # K cache (per batch, incremental)
                pltpu.VMEM((Tp, Hp), mxu_dtype),   # V cache (per batch, incremental)
            ],
        ),
        compiler_params=pltpu.CompilerParams(
            dimension_semantics=("parallel", "arbitrary"),
            vmem_limit_bytes=int(vmem_limit_bytes),
        ),
        cost_estimate=pl.CostEstimate(
            flops=flops,
            transcendentals=int(B * Tp * Tp // 2),
            bytes_accessed=bytes_accessed,
        ),
    )(x, wq, wk, wv)

    return out[:, :T, :H]


def reference_attention_head(x, wq, wk, wv):
    """Pure-JAX reference matching the PyTorch forward (eval mode)."""
    q = x @ wq
    k = x @ wk
    v = x @ wv
    d_head = k.shape[-1]
    wts = (q @ jnp.swapaxes(k, -2, -1)) * (d_head ** -0.5)
    T = x.shape[-2]
    mask = jnp.tril(jnp.ones((T, T), dtype=bool))
    wts = jnp.where(mask, wts, -jnp.inf)
    wts = jax.nn.softmax(wts, axis=-1)
    return wts @ v


if __name__ == "__main__":
    key = jax.random.PRNGKey(0)

    # --- test 1: small shapes matching the module (B=2, block_size T=8, E=32, H=16) ---
    B, T, E, H = 2, 8, 32, 16
    kx, kq, kk, kv = jax.random.split(key, 4)
    x = jax.random.normal(kx, (B, T, E), dtype=jnp.float32)
    wq = jax.random.normal(kq, (E, H), dtype=jnp.float32) * (E ** -0.5)
    wk = jax.random.normal(kk, (E, H), dtype=jnp.float32) * (E ** -0.5)
    wv = jax.random.normal(kv, (E, H), dtype=jnp.float32) * (E ** -0.5)

    out = jax.block_until_ready(attention_head(x, wq, wk, wv))
    ref = reference_attention_head(x, wq, wk, wv)
    assert out.shape == (B, T, H)
    assert jnp.allclose(out, ref, atol=2e-2, rtol=2e-2), "mismatch vs reference (small, bf16 MXU)"

    # --- test 2: exercises query tiling, causal K-tiling, incremental K/V, padding ---
    B2, T2, E2, H2 = 1, 300, 128, 64   # T2 > tq=256 -> 2 query tiles + padded tail
    k2 = jax.random.split(key, 8)
    x2 = jax.random.normal(k2[4], (B2, T2, E2), dtype=jnp.float32)
    wq2 = jax.random.normal(k2[5], (E2, H2), dtype=jnp.float32) * (E2 ** -0.5)
    wk2 = jax.random.normal(k2[6], (E2, H2), dtype=jnp.float32) * (E2 ** -0.5)
    wv2 = jax.random.normal(k2[7], (E2, H2), dtype=jnp.float32) * (E2 ** -0.5)
    ref2 = reference_attention_head(x2, wq2, wk2, wv2)

    # default bf16-MXU path (f32 accumulation), looser tolerance
    out2 = jax.block_until_ready(attention_head(x2, wq2, wk2, wv2))
    assert out2.shape == (B2, T2, H2)
    assert jnp.allclose(out2, ref2, atol=3e-2, rtol=3e-2), "mismatch vs reference (tiled, bf16 MXU)"

    # full-f32 path validates the tiling/flash algorithm at tight tolerance
    out2f = jax.block_until_ready(attention_head(x2, wq2, wk2, wv2, mxu_bf16=False))
    assert jnp.allclose(out2f, ref2, atol=1e-2, rtol=1e-2), "mismatch vs reference (tiled, f32)"

    print("KERNEL_OK")
</pallas_src>

<mosaic_0001>
module attributes {stable_mosaic.version = 11 : i64} {
  func.func @_attn_head_kernel(%arg0: i32, %arg1: i32, %arg2: memref<1x8x32xf32, #tpu.memory_space<vmem>>, %arg3: memref<32x16xbf16, #tpu.memory_space<vmem>>, %arg4: memref<32x16xbf16, #tpu.memory_space<vmem>>, %arg5: memref<32x16xbf16, #tpu.memory_space<vmem>>, %arg6: memref<1x8x16xf32, #tpu.memory_space<vmem>>, %arg7: memref<8x16xbf16, #tpu.memory_space<vmem>>, %arg8: memref<8x16xbf16, #tpu.memory_space<vmem>>) attributes {dimension_semantics = [#tpu.dimension_semantics<parallel>, #tpu.dimension_semantics<arbitrary>], iteration_bounds = array<i64: 2, 1>, scalar_prefetch = 0 : i64, scratch_operands = 2 : i64, tpu.core_type = #tpu.core_type<tc>, window_params = [{transform_indices = @transform_0, window_bounds = array<i64: 1, 8, 32>}, {pipeline_mode = #tpu.pipeline_mode<synchronous>, transform_indices = @transform_1, window_bounds = array<i64: 32, 16>}, {pipeline_mode = #tpu.pipeline_mode<synchronous>, transform_indices = @transform_2, window_bounds = array<i64: 32, 16>}, {pipeline_mode = #tpu.pipeline_mode<synchronous>, transform_indices = @transform_3, window_bounds = array<i64: 32, 16>}, {transform_indices = @transform_4, window_bounds = array<i64: 1, 8, 16>}]} {
    %c8_i32 = arith.constant 8 : i32
    %0 = arith.muli %arg1, %c8_i32 : i32
    %1 = tpu.assume_multiple %0, 8 : i32
    %c0 = arith.constant 0 : index
    %c0_0 = arith.constant 0 : index
    %c0_1 = arith.constant 0 : index
    %2 = vector.load %arg2[%c0, %c0_0, %c0_1] : memref<1x8x32xf32, #tpu.memory_space<vmem>>, vector<1x8x32xf32>
    %3 = vector.shape_cast %2 : vector<1x8x32xf32> to vector<8x32xf32>
    %4 = arith.truncf %3 : vector<8x32xf32> to vector<8x32xbf16>
    %c0_2 = arith.constant 0 : index
    %c0_3 = arith.constant 0 : index
    %5 = vector.load %arg4[%c0_2, %c0_3] : memref<32x16xbf16, #tpu.memory_space<vmem>>, vector<32x16xbf16>
    %cst = arith.constant dense<0.000000e+00> : vector<8x16xf32>
    %6 = tpu.matmul %4, %5, %cst {dimension_numbers = #tpu.dot_dimension_numbers<[1], [0], [0], [1], [0, 0, 1, 1], [], []>} : vector<8x32xbf16>, vector<32x16xbf16>, vector<8x16xf32> -> vector<8x16xf32>
    %7 = arith.truncf %6 : vector<8x16xf32> to vector<8x16xbf16>
    %8 = arith.index_cast %1 : i32 to index
    %c0_4 = arith.constant 0 : index
    %9 = vector.load %arg7[%8, %c0_4] : memref<8x16xbf16, #tpu.memory_space<vmem>>, vector<8x16xbf16>
    tpu.vector_store %arg7[%8, %c0_4], %7 {strides = array<i32>} : memref<8x16xbf16, #tpu.memory_space<vmem>>, vector<8x16xbf16>,
    %c0_5 = arith.constant 0 : index
    %c0_6 = arith.constant 0 : index
    %10 = vector.load %arg5[%c0_5, %c0_6] : memref<32x16xbf16, #tpu.memory_space<vmem>>, vector<32x16xbf16>
    %cst_7 = arith.constant dense<0.000000e+00> : vector<8x16xf32>
    %11 = tpu.matmul %4, %10, %cst_7 {dimension_numbers = #tpu.dot_dimension_numbers<[1], [0], [0], [1], [0, 0, 1, 1], [], []>} : vector<8x32xbf16>, vector<32x16xbf16>, vector<8x16xf32> -> vector<8x16xf32>
    %12 = arith.truncf %11 : vector<8x16xf32> to vector<8x16xbf16>
    %13 = arith.index_cast %1 : i32 to index
    %c0_8 = arith.constant 0 : index
    %14 = vector.load %arg8[%13, %c0_8] : memref<8x16xbf16, #tpu.memory_space<vmem>>, vector<8x16xbf16>
    tpu.vector_store %arg8[%13, %c0_8], %12 {strides = array<i32>} : memref<8x16xbf16, #tpu.memory_space<vmem>>, vector<8x16xbf16>,
    %c0_9 = arith.constant 0 : index
    %c0_10 = arith.constant 0 : index
    %15 = vector.load %arg3[%c0_9, %c0_10] : memref<32x16xbf16, #tpu.memory_space<vmem>>, vector<32x16xbf16>
    %cst_11 = arith.constant dense<0.000000e+00> : vector<8x16xf32>
    %16 = tpu.matmul %4, %15, %cst_11 {dimension_numbers = #tpu.dot_dimension_numbers<[1], [0], [0], [1], [0, 0, 1, 1], [], []>} : vector<8x32xbf16>, vector<32x16xbf16>, vector<8x16xf32> -> vector<8x16xf32>
    %cst_12 = arith.constant 2.500000e-01 : f32
    %17 = vector.broadcast %cst_12 : f32 to vector<8x16xf32>
    %18 = arith.mulf %16, %17 : vector<8x16xf32>
    %19 = arith.truncf %18 : vector<8x16xf32> to vector<8x16xbf16>
    %cst_13 = arith.constant -1.000000e+30 : f32
    %20 = vector.broadcast %cst_13 : f32 to vector<8x1xf32>
    %cst_14 = arith.constant 0.000000e+00 : f32
    %21 = vector.broadcast %cst_14 : f32 to vector<8x1xf32>
    %cst_15 = arith.constant 0.000000e+00 : f32
    %22 = vector.broadcast %cst_15 : f32 to vector<8x16xf32>
    %c0_i32 = arith.constant 0 : i32
    %23 = arith.subi %arg1, %c0_i32 : i32
    %24 = arith.addi %c0_i32, %23 : i32
    %c1_i32 = arith.constant 1 : i32
    %25:3 = scf.for %arg9 = %c0_i32 to %24 step %c1_i32 iter_args(%arg10 = %20, %arg11 = %21, %arg12 = %22) -> (vector<8x1xf32>, vector<8x1xf32>, vector<8x16xf32>)  : i32 {
      %c8_i32_27 = arith.constant 8 : i32
      %61 = arith.muli %arg9, %c8_i32_27 : i32
      %62 = tpu.assume_multiple %61, 8 : i32
      %63 = arith.index_cast %62 : i32 to index
      %c0_28 = arith.constant 0 : index
      %64 = vector.load %arg7[%63, %c0_28] : memref<8x16xbf16, #tpu.memory_space<vmem>>, vector<8x16xbf16>
      %65 = arith.index_cast %62 : i32 to index
      %c0_29 = arith.constant 0 : index
      %66 = vector.load %arg8[%65, %c0_29] : memref<8x16xbf16, #tpu.memory_space<vmem>>, vector<8x16xbf16>
      %cst_30 = arith.constant dense<0.000000e+00> : vector<8x8xf32>
      %67 = tpu.matmul %19, %64, %cst_30 {dimension_numbers = #tpu.dot_dimension_numbers<[1], [1], [0], [0], [0, 0, 1, 0], [], []>} : vector<8x16xbf16>, vector<8x16xbf16>, vector<8x8xf32> -> vector<8x8xf32>
      %cst_31 = arith.constant dense<0xFF800000> : vector<8xf32>
      %68 = vector.multi_reduction <maximumf>, %67, %cst_31 [1] : vector<8x8xf32> to vector<8xf32>
      %69 = vector.shape_cast %68 : vector<8xf32> to vector<8x1xf32>
      %70 = arith.maximumf %arg10, %69 : vector<8x1xf32>
      %71 = arith.subf %arg10, %70 : vector<8x1xf32>
      %72 = math.exp %71 : vector<8x1xf32>
      %73 = vector.broadcast %70 : vector<8x1xf32> to vector<8x8xf32>
      %74 = arith.subf %67, %73 : vector<8x8xf32>
      %75 = math.exp %74 : vector<8x8xf32>
      %76 = arith.mulf %72, %arg11 : vector<8x1xf32>
      %cst_32 = arith.constant dense<0.000000e+00> : vector<8xf32>
      %77 = vector.multi_reduction <add>, %75, %cst_32 [1] : vector<8x8xf32> to vector<8xf32>
      %78 = vector.shape_cast %77 : vector<8xf32> to vector<8x1xf32>
      %79 = arith.addf %76, %78 : vector<8x1xf32>
      %80 = vector.broadcast %72 : vector<8x1xf32> to vector<8x16xf32>
      %81 = arith.mulf %80, %arg12 : vector<8x16xf32>
      %82 = arith.truncf %75 : vector<8x8xf32> to vector<8x8xbf16>
      %cst_33 = arith.constant dense<0.000000e+00> : vector<8x16xf32>
      %83 = tpu.matmul %82, %66, %cst_33 {dimension_numbers = #tpu.dot_dimension_numbers<[1], [0], [0], [1], [0, 0, 1, 1], [], []>} : vector<8x8xbf16>, vector<8x16xbf16>, vector<8x16xf32> -> vector<8x16xf32>
      %84 = arith.addf %81, %83 : vector<8x16xf32>
      scf.yield %70, %79, %84 : vector<8x1xf32>, vector<8x1xf32>, vector<8x16xf32>
    }
    %c8_i32_16 = arith.constant 8 : i32
    %26 = arith.muli %arg1, %c8_i32_16 : i32
    %27 = tpu.assume_multiple %26, 8 : i32
    %28 = arith.index_cast %27 : i32 to index
    %c0_17 = arith.constant 0 : index
    %29 = vector.load %arg7[%28, %c0_17] : memref<8x16xbf16, #tpu.memory_space<vmem>>, vector<8x16xbf16>
    %30 = arith.index_cast %27 : i32 to index
    %c0_18 = arith.constant 0 : index
    %31 = vector.load %arg8[%30, %c0_18] : memref<8x16xbf16, #tpu.memory_space<vmem>>, vector<8x16xbf16>
    %cst_19 = arith.constant dense<0.000000e+00> : vector<8x8xf32>
    %32 = tpu.matmul %19, %29, %cst_19 {dimension_numbers = #tpu.dot_dimension_numbers<[1], [1], [0], [0], [0, 0, 1, 0], [], []>} : vector<8x16xbf16>, vector<8x16xbf16>, vector<8x8xf32> -> vector<8x8xf32>
    %33 = tpu.iota {dimensions = array<i32: 0>} : vector<8x8xi32>
    %34 = tpu.iota {dimensions = array<i32: 1>} : vector<8x8xi32>
    %35 = arith.cmpi sle, %34, %33 : vector<8x8xi32>
    %cst_20 = arith.constant -1.000000e+30 : f32
    %36 = vector.broadcast %cst_20 : f32 to vector<8x8xf32>
    %37 = arith.select %35, %32, %36 : vector<8x8xi1>, vector<8x8xf32>
    %cst_21 = arith.constant dense<0xFF800000> : vector<8xf32>
    %38 = vector.multi_reduction <maximumf>, %37, %cst_21 [1] : vector<8x8xf32> to vector<8xf32>
    %39 = vector.shape_cast %38 : vector<8xf32> to vector<8x1xf32>
    %40 = arith.maximumf %25#0, %39 : vector<8x1xf32>
    %41 = arith.subf %25#0, %40 : vector<8x1xf32>
    %42 = math.exp %41 : vector<8x1xf32>
    %43 = vector.broadcast %40 : vector<8x1xf32> to vector<8x8xf32>
    %44 = arith.subf %37, %43 : vector<8x8xf32>
    %45 = math.exp %44 : vector<8x8xf32>
    %46 = arith.mulf %42, %25#1 : vector<8x1xf32>
    %cst_22 = arith.constant dense<0.000000e+00> : vector<8xf32>
    %47 = vector.multi_reduction <add>, %45, %cst_22 [1] : vector<8x8xf32> to vector<8xf32>
    %48 = vector.shape_cast %47 : vector<8xf32> to vector<8x1xf32>
    %49 = arith.addf %46, %48 : vector<8x1xf32>
    %50 = vector.broadcast %42 : vector<8x1xf32> to vector<8x16xf32>
    %51 = arith.mulf %50, %25#2 : vector<8x16xf32>
    %52 = arith.truncf %45 : vector<8x8xf32> to vector<8x8xbf16>
    %cst_23 = arith.constant dense<0.000000e+00> : vector<8x16xf32>
    %53 = tpu.matmul %52, %31, %cst_23 {dimension_numbers = #tpu.dot_dimension_numbers<[1], [0], [0], [1], [0, 0, 1, 1], [], []>} : vector<8x8xbf16>, vector<8x16xbf16>, vector<8x16xf32> -> vector<8x16xf32>
    %54 = arith.addf %51, %53 : vector<8x16xf32>
    %55 = tpu.reciprocal %49 {approx = true} : vector<8x1xf32> -> vector<8x1xf32>
    %56 = vector.broadcast %55 : vector<8x1xf32> to vector<8x16xf32>
    %57 = arith.mulf %54, %56 : vector<8x16xf32>
    %c0_24 = arith.constant 0 : index
    %c0_25 = arith.constant 0 : index
    %c0_26 = arith.constant 0 : index
    %58 = vector.load %arg6[%c0_24, %c0_25, %c0_26] : memref<1x8x16xf32, #tpu.memory_space<vmem>>, vector<1x8x16xf32>
    %59 = vector.shape_cast %58 : vector<1x8x16xf32> to vector<8x16xf32>
    %60 = vector.shape_cast %57 : vector<8x16xf32> to vector<1x8x16xf32>
    tpu.vector_store %arg6[%c0_24, %c0_25, %c0_26], %60 {strides = array<i32>} : memref<1x8x16xf32, #tpu.memory_space<vmem>>, vector<1x8x16xf32>,
    return
  }
  func.func @transform_0(%arg0: i32, %arg1: i32) -> (i32, i32, i32) {
    %c0_i32 = arith.constant 0 : i32
    %c0_i32_0 = arith.constant 0 : i32
    return %arg0, %arg1, %c0_i32 : i32, i32, i32
  }
  func.func @transform_1(%arg0: i32, %arg1: i32) -> (i32, i32) {
    %c0_i32 = arith.constant 0 : i32
    %c0_i32_0 = arith.constant 0 : i32
    %c0_i32_1 = arith.constant 0 : i32
    return %c0_i32, %c0_i32_0 : i32, i32
  }
  func.func @transform_2(%arg0: i32, %arg1: i32) -> (i32, i32) {
    %c0_i32 = arith.constant 0 : i32
    %c0_i32_0 = arith.constant 0 : i32
    %c0_i32_1 = arith.constant 0 : i32
    return %c0_i32, %c0_i32_0 : i32, i32
  }
  func.func @transform_3(%arg0: i32, %arg1: i32) -> (i32, i32) {
    %c0_i32 = arith.constant 0 : i32
    %c0_i32_0 = arith.constant 0 : i32
    %c0_i32_1 = arith.constant 0 : i32
    return %c0_i32, %c0_i32_0 : i32, i32
  }
  func.func @transform_4(%arg0: i32, %arg1: i32) -> (i32, i32, i32) {
    %c0_i32 = arith.constant 0 : i32
    %c0_i32_0 = arith.constant 0 : i32
    return %arg0, %arg1, %c0_i32 : i32, i32, i32
  }
}

</mosaic_0001>

<llo_original>
// kernel: tpu_custom_call.1
$region0: #{tpu_custom_call.1}
  #allocation0 [shape = 'u32[]', space=smem, size = 0x4, offset = 0x4, fixed_abs, tag = 'smem constant byte address 0x4 - core index']
  #allocation1 [shape = 'u32[144,128]{1,0:T(1,128)}', space=vmem, size = 0x12000, scoped, tag = 'internal scratch']
  #allocation2 [shape = 'bf16[8,16]{1,0:T(8,128)(2,1)}', space=vmem, size = 0x800, scoped, tag = 'scratch operand']
  #allocation3 [shape = 'bf16[8,16]{1,0:T(8,128)(2,1)}', space=vmem, size = 0x800, scoped, tag = 'scratch operand']
  %s0 = inlined_call_operand.hbm [shape: f32[2,8,32], index: 0, kind: input, shape index: {}]
  %s1 = inlined_call_operand.hbm [shape: bf16[32,16], index: 1, kind: input, shape index: {}]
  %s2 = inlined_call_operand.hbm [shape: bf16[32,16], index: 2, kind: input, shape index: {}]
  %s3 = inlined_call_operand.hbm [shape: bf16[32,16], index: 3, kind: input, shape index: {}]
  %s4 = inlined_call_operand.hbm [shape: f32[2,8,16], index: 4, kind: output, shape index: {}]
  %s5 = sld [smem:[#allocation0]]
  $region72: #{tpu_custom_call.1} parent=0
    _
  %s7 = ssub.s32 1, %s5
  %s8 = scalar_select 0, %s7, %s5
  $region1: #{tpu_custom_call.1} parent=0
    #allocation4 [shape = 'u8[8192]{0}', space=vmem, size = 0x2000, scoped, tag = 'input window, operand 0']
    #allocation5 [shape = 's32[2]{0}', space=sflag, size = 0x8, scoped, tag = 'scoped memory for tpu_custom_call.1']
    #allocation6 [shape = 's32[2]{0}', space=sflag, size = 0x8, scoped, tag = 'scoped memory for tpu_custom_call.1']
    #allocation7 [shape = 'u8[8192]{0}', space=vmem, size = 0x2000, scoped, tag = 'input window, operand 1, single buffered']
    #allocation8 [shape = 's32[1]{0}', space=sflag, size = 0x4, scoped, tag = 'scoped memory for tpu_custom_call.1']
    #allocation9 [shape = 'u8[8192]{0}', space=vmem, size = 0x2000, scoped, tag = 'input window, operand 2, single buffered']
    #allocation10 [shape = 'u8[8192]{0}', space=vmem, size = 0x2000, scoped, tag = 'input window, operand 3, single buffered']
    #allocation11 [shape = 's32[1]{0}', space=sflag, size = 0x4, scoped, tag = 'scoped memory for tpu_custom_call.1']
    #allocation12 [shape = 'u8[8192]{0}', space=vmem, size = 0x2000, scoped, tag = 'output window, operand 0']
    %9 = vsyncpa [#allocation5], 0
    %s10 = scalar_lea.sflag [#allocation5], 1
    %11 = vsyncpa %s10, 0
    %12 = vsyncpa [#allocation8], 0
    %13 = vsyncpa [#allocation11], 0
    %14 = vsyncpa [#allocation6], 0
    %s15 = scalar_lea.sflag [#allocation6], 1
    %16 = vsyncpa %s15, 0
    loop: start=0, step=1, limit=4
    $region2: #{tpu_custom_call.1} parent=1 // loop_pre_header
      _
    $region3: #{tpu_custom_call.1} parent=1 // loop_header
      %s18 = sphi 0, %s22
      %p19 = scmp.ge.s32.totalorder %s18, 4
      %s25 = sphi 0, %s37
      %s26 = sphi 0, %s33
      %s27 = sphi 0, %s25
      %s28 = sphi 0, %s26
      %s29 = sphi 0, %s27
      %s30 = sphi 0, %s28
      %s42 = sphi 0, %s44
      %s45 = sphi 0, %s42
      %s46 = sphi 0, %s45
      %s62 = sphi 0, %s46
      %s66 = sphi 0, %s66
      %s68 = sphi 0, %s66
      %s69 = sphi 0, %s68
      %s83 = sphi 0, %s69
      %s87 = sphi 0, %s87
      %s89 = sphi 0, %s87
      %s90 = sphi 0, %s89
      %s104 = sphi 0, %s90
      %s108 = sphi 0, %s108
      %s110 = sphi 0, %s108
      %s111 = sphi 0, %s110
      %s125 = sphi 0, %s111
      %s133 = sphi 0, %s135
      %s136 = sphi 0, %s133
      %s137 = sphi 0, %s136
      %s153 = sphi 0, %s137
    $region4: #{tpu_custom_call.1} parent=1 // loop_header_branch
      %21 = sbr.rel (%p19) target = $region8
    $region5: #{tpu_custom_call.1} parent=1 // loop_body
      %s23 = ssub.s32 %s18, 1
      %s24 = ssub.s32 %s18, 2
      %s31 = sadd.s32 1, %s26
      %p32 = scmp.ge.s32.totalorder %s31, 1
      %s33 = scalar_select %p32, 0, %s31
      %s34 = sadd.s32 1, %s25
      %s35 = scalar_select %p32, %s34, %s25
      %p36 = scmp.ge.s32.totalorder %s35, 2
      %s37 = scalar_select %p36, 0, %s35
      %s38 = ssub.s32 %s25, %s37
      %s39 = ssub.s32 %s26, %s33
      %s40 = sor.u32 %s38, %s39
      %p41 = scmp.eq.s32.totalorder %s40, 0
      %s43 = sadd.s32 %s42, 1
      %s44 = scalar_select %p41, %s42, %s43
      %p47 = pneg %p41
      %p48 = scmp.eq.s32.totalorder %s18, 1
      %p49 = por %p47, %p48
      %p50 = scmp.ne.s32.totalorder %s42, %s45
      %p51 = scmp.eq.s32.totalorder %s18, 0
      %p52 = por %p50, %p51
      %p53 = scmp.ne.s32.totalorder %s42, %s45
      %p54 = scmp.eq.s32.totalorder %s23, 1
      %p55 = por %p53, %p54
      %p56 = scmp.ne.s32.totalorder %s45, %s46
      %p57 = scmp.eq.s32.totalorder %s23, 0
      %p58 = por %p56, %p57
      %p59 = scmp.ne.s32.totalorder %s45, %s46
      %p60 = scmp.eq.s32.totalorder %s24, 1
      %p61 = por %p59, %p60
      %p63 = scmp.ne.s32.totalorder %s46, %s62
      %p64 = scmp.eq.s32.totalorder %s24, 0
      %p65 = por %p63, %p64
      %s67 = sadd.s32 %s66, 1
      %p70 = scmp.eq.s32.totalorder %s18, 1
      %p71 = scmp.ne.s32.totalorder %s66, %s68
      %p72 = scmp.eq.s32.totalorder %s18, 0
      %p73 = por %p71, %p72
      %p74 = scmp.ne.s32.totalorder %s66, %s68
      %p75 = scmp.eq.s32.totalorder %s23, 1
      %p76 = por %p74, %p75
      %p77 = scmp.ne.s32.totalorder %s68, %s69
      %p78 = scmp.eq.s32.totalorder %s23, 0
      %p79 = por %p77, %p78
      %p80 = scmp.ne.s32.totalorder %s68, %s69
      %p81 = scmp.eq.s32.totalorder %s24, 1
      %p82 = por %p80, %p81
      %p84 = scmp.ne.s32.totalorder %s69, %s83
      %p85 = scmp.eq.s32.totalorder %s24, 0
      %p86 = por %p84, %p85
      %s88 = sadd.s32 %s87, 1
      %p91 = scmp.eq.s32.totalorder %s18, 1
      %p92 = scmp.ne.s32.totalorder %s87, %s89
      %p93 = scmp.eq.s32.totalorder %s18, 0
      %p94 = por %p92, %p93
      %p95 = scmp.ne.s32.totalorder %s87, %s89
      %p96 = scmp.eq.s32.totalorder %s23, 1
      %p97 = por %p95, %p96
      %p98 = scmp.ne.s32.totalorder %s89, %s90
      %p99 = scmp.eq.s32.totalorder %s23, 0
      %p100 = por %p98, %p99
      %p101 = scmp.ne.s32.totalorder %s89, %s90
      %p102 = scmp.eq.s32.totalorder %s24, 1
      %p103 = por %p101, %p102
      %p105 = scmp.ne.s32.totalorder %s90, %s104
      %p106 = scmp.eq.s32.totalorder %s24, 0
      %p107 = por %p105, %p106
      %s109 = sadd.s32 %s108, 1
      %p112 = scmp.eq.s32.totalorder %s18, 1
      %p113 = scmp.ne.s32.totalorder %s108, %s110
      %p114 = scmp.eq.s32.totalorder %s18, 0
      %p115 = por %p113, %p114
      %p116 = scmp.ne.s32.totalorder %s108, %s110
      %p117 = scmp.eq.s32.totalorder %s23, 1
      %p118 = por %p116, %p117
      %p119 = scmp.ne.s32.totalorder %s110, %s111
      %p120 = scmp.eq.s32.totalorder %s23, 0
      %p121 = por %p119, %p120
      %p122 = scmp.ne.s32.totalorder %s110, %s111
      %p123 = scmp.eq.s32.totalorder %s24, 1
      %p124 = por %p122, %p123
      %p126 = scmp.ne.s32.totalorder %s111, %s125
      %p127 = scmp.eq.s32.totalorder %s24, 0
      %p128 = por %p126, %p127
      %s129 = ssub.s32 %s25, %s37
      %s130 = ssub.s32 %s26, %s33
      %s131 = sor.u32 %s129, %s130
      %p132 = scmp.eq.s32.totalorder %s131, 0
      %s134 = sadd.s32 %s133, 1
      %s135 = scalar_select %p132, %s133, %s134
      %p138 = pneg %p132
      %p139 = scmp.eq.s32.totalorder %s18, 1
      %p140 = por %p138, %p139
      %p141 = scmp.ne.s32.totalorder %s133, %s136
      %p142 = scmp.eq.s32.totalorder %s18, 0
      %p143 = por %p141, %p142
      %p144 = scmp.ne.s32.totalorder %s133, %s136
      %p145 = scmp.eq.s32.totalorder %s23, 1
      %p146 = por %p144, %p145
      %p147 = scmp.ne.s32.totalorder %s136, %s137
      %p148 = scmp.eq.s32.totalorder %s23, 0
      %p149 = por %p147, %p148
      %p150 = scmp.ne.s32.totalorder %s136, %s137
      %p151 = scmp.eq.s32.totalorder %s24, 1
      %p152 = por %p150, %p151
      %p154 = scmp.ne.s32.totalorder %s137, %s153
      %p155 = scmp.eq.s32.totalorder %s24, 0
      %p156 = por %p154, %p155
      %p157 = scmp.le.s32.totalorder 1, %s18
      %p158 = scmp.lt.s32.totalorder %s18, 3
      %p159 = pnand %p157, %p158
      %p160 = pneg %p159
      // Predicated region
      $region9: #{tpu_custom_call.1} parent=5 // pred_check
        _
      $region10: #{tpu_custom_call.1} parent=5 // pred_check_branch
        %162 = sbr.rel (%p159) target = $region12
      $region11: #{tpu_custom_call.1} parent=5 // pred_region
        %s163 = ssub.s32 %s18, 1
        // Predicated region
        $region13: #{tpu_custom_call.1} parent=11 // pred_check
          %p164 = pneg %p79
        $region14: #{tpu_custom_call.1} parent=11 // pred_check_branch
          %166 = sbr.rel (%p164) target = $region16
        $region15: #{tpu_custom_call.1} parent=11 // pred_region
          %s168 = ssub.s32 256, 256
          %169 = vsyncadd [#allocation8], %s168
          %s170 = sshll.u32 [#allocation7], 4
          %s171 = int_to_ptr.vmem [resolvable:$true] %s170
          %176 = dma.hbm_to_vmem [thread:$0]  %s1, 256, %s171, [#allocation8], 64, 64, 4
        $region16: #{tpu_custom_call.1} parent=11 // pred_fallthru
          _
        // Predicated region
        $region17: #{tpu_custom_call.1} parent=11 // pred_check
          %p177 = pneg %p100
        $region18: #{tpu_custom_call.1} parent=11 // pred_check_branch
          %179 = sbr.rel (%p177) target = $region20
        $region19: #{tpu_custom_call.1} parent=11 // pred_region
          %s181 = ssub.s32 256, 256
          %182 = vsyncadd [#allocation8], %s181
          %s183 = sshll.u32 [#allocation9], 4
          %s184 = int_to_ptr.vmem [resolvable:$true] %s183
          %189 = dma.hbm_to_vmem [thread:$0]  %s2, 256, %s184, [#allocation8], 64, 64, 4
        $region20: #{tpu_custom_call.1} parent=11 // pred_fallthru
          _
        // Predicated region
        $region21: #{tpu_custom_call.1} parent=11 // pred_check
          %p190 = pneg %p121
        $region22: #{tpu_custom_call.1} parent=11 // pred_check_branch
          %192 = sbr.rel (%p190) target = $region24
        $region23: #{tpu_custom_call.1} parent=11 // pred_region
          %s194 = ssub.s32 256, 256
          %195 = vsyncadd [#allocation11], %s194
          %s196 = sshll.u32 [#allocation10], 4
          %s197 = int_to_ptr.vmem [resolvable:$true] %s196
          %202 = dma.hbm_to_vmem [thread:$0]  %s3, 256, %s197, [#allocation11], 64, 64, 4
        $region24: #{tpu_custom_call.1} parent=11 // pred_fallthru
          _
      $region12: #{tpu_custom_call.1} parent=5 // pred_fallthru
        _
      %p203 = scmp.lt.s32.totalorder %s18, 2
      // Predicated region
      $region25: #{tpu_custom_call.1} parent=5 // pred_check
        %p204 = pneg %p203
      $region26: #{tpu_custom_call.1} parent=5 // pred_check_branch
        %206 = sbr.rel (%p204) target = $region28
      $region27: #{tpu_custom_call.1} parent=5 // pred_region
        // Predicated region
        $region29: #{tpu_custom_call.1} parent=27 // pred_check
          %p207 = pneg %p52
        $region30: #{tpu_custom_call.1} parent=27 // pred_check_branch
          %209 = sbr.rel (%p207) target = $region32
        $region31: #{tpu_custom_call.1} parent=27 // pred_region
          %s210 = sand.u32 %s42, 1
          %s211 = scalar_lea.sflag [#allocation5], %s210
          %s212 = sand.u32 %s42, 1
          %s213 = smul.addr %s212, 8
          %s214 = scalar_lea.vmem [#allocation4], %s213
          %s216 = ssub.s32 128, 128
          %217 = vsyncadd %s211, %s216
          %s218 = sadd.s32 %s26, %s25
          %s219 = smul.addr %s218, 128
          %s220 = scalar_lea.hbm %s0, %s219
          %s222 = sshll.u32 %s214, 4
          %s223 = int_to_ptr.vmem [resolvable:$true] %s222
          %225 = dma.hbm_to_vmem [thread:$0]  %s220, 128, %s223, %s211
        $region32: #{tpu_custom_call.1} parent=27 // pred_fallthru
          _
      $region28: #{tpu_custom_call.1} parent=5 // pred_fallthru
        _
      %p226 = scmp.le.s32.totalorder 1, %s18
      %p227 = scmp.lt.s32.totalorder %s18, 3
      %p228 = pnand %p226, %p227
      %p229 = pneg %p228
      // Predicated region
      $region33: #{tpu_custom_call.1} parent=5 // pred_check
        _
      $region34: #{tpu_custom_call.1} parent=5 // pred_check_branch
        %231 = sbr.rel (%p228) target = $region36
      $region35: #{tpu_custom_call.1} parent=5 // pred_region
        %s232 = ssub.s32 %s18, 1
        %s233 = sand.u32 %s45, 1
        %s234 = scalar_lea.sflag [#allocation5], %s233
        %s235 = sand.u32 %s45, 1
        %s236 = smul.addr %s235, 8
        %s237 = scalar_lea.vmem [#allocation4], %s236
        // Predicated region
        $region37: #{tpu_custom_call.1} parent=35 // pred_check
          %p238 = pneg %p58
        $region38: #{tpu_custom_call.1} parent=35 // pred_check_branch
          %240 = sbr.rel (%p238) target = $region40
        $region39: #{tpu_custom_call.1} parent=35 // pred_region
          %241 = dma.done %s234, 128
        $region40: #{tpu_custom_call.1} parent=35 // pred_fallthru
          _
        // Predicated region
        $region41: #{tpu_custom_call.1} parent=35 // pred_check
          %p242 = pneg %p79
        $region42: #{tpu_custom_call.1} parent=35 // pred_check_branch
          %244 = sbr.rel (%p242) target = $region44
        $region43: #{tpu_custom_call.1} parent=35 // pred_region
          %245 = dma.done [#allocation8], 256
        $region44: #{tpu_custom_call.1} parent=35 // pred_fallthru
          _
        // Predicated region
        $region45: #{tpu_custom_call.1} parent=35 // pred_check
          %p246 = pneg %p100
        $region46: #{tpu_custom_call.1} parent=35 // pred_check_branch
          %248 = sbr.rel (%p246) target = $region48
        $region47: #{tpu_custom_call.1} parent=35 // pred_region
          %249 = dma.done [#allocation8], 256
        $region48: #{tpu_custom_call.1} parent=35 // pred_fallthru
          _
        // Predicated region
        $region49: #{tpu_custom_call.1} parent=35 // pred_check
          %p250 = pneg %p121
        $region50: #{tpu_custom_call.1} parent=35 // pred_check_branch
          %252 = sbr.rel (%p250) target = $region52
        $region51: #{tpu_custom_call.1} parent=35 // pred_region
          %253 = dma.done [#allocation11], 256
        $region52: #{tpu_custom_call.1} parent=35 // pred_fallthru
          _
        %s254 = sand.u32 %s45, 1
        %s255 = scalar_lea.sflag [#allocation5], %s254
        %s256 = sand.u32 %s45, 1
        %s257 = smul.addr %s256, 8
        %s258 = scalar_lea.vmem [#allocation4], %s257
        %p259 = pneg %p58
        %p260 = pneg %p55
        %p261 = pneg %p79
        %p262 = pneg %p76
        %p263 = pneg %p100
        %p264 = pneg %p97
        %p265 = pneg %p121
        %p266 = pneg %p118
        %p267 = pneg %p149
        %p268 = pneg %p146
        %s269 = sand.u32 %s136, 1
        %s270 = scalar_lea.sflag [#allocation6], %s269
        %s271 = sand.u32 %s136, 1
        %s272 = smul.addr %s271, 8
        %s273 = scalar_lea.vmem [#allocation12], %s272
        %s275 = smul.u32 %s28, 8
        %v276 = vld [vmem:[%s237] sm:$0xff]
        %v277 = vpack.c.bf16 %v276, %v276
        %v278 = vld [vmem:[#allocation9] sm:$0xf]
        %v279 = vld [vmem:[#allocation9 + $0x4] sm:$0xf]
        %v280 = vld [vmem:[#allocation9 + $0x8] sm:$0xf]
        %v281 = vld [vmem:[#allocation9 + $0xc] sm:$0xf]
        %v286 = vunpack.c.l.b16 %v278
        %v287 = vunpack.c.l.b16 %v279
        %v288 = vunpack.c.l.b16 %v280
        %v289 = vunpack.c.l.b16 %v281
        %v290 = vpack.c.b16 %v287, %v286
        %v291 = vpack.c.b16 %v289, %v288
        %vm294 = vcmask 261120
        %v296 = vsel %vm294, %v277, 0
        %298 = vmatprep.subr.bf16.mxu0 0
        %299 = vmatpush1.bf16.msra.mxu0 %v290
        %300 = vmatprep.subr.bf16.mxu0 0
        %301 = vmatpush1.bf16.msra.mxu0 %v291
        %302 = vmatprep.subr.bf16.mxu0 0
        %303 = vmatpush1.bf16.msra.mxu0 0
        %304 = vmatprep.subr.bf16.mxu0 0
        %305 = vmatpush1.bf16.msra.mxu0 0
        %306 = vmatprep.subr.bf16.mxu0 0
        %307 = vmatpush1.bf16.msra.mxu0 0
        %308 = vmatprep.subr.bf16.mxu0 0
        %309 = vmatpush1.bf16.msra.mxu0 0
        %310 = vmatprep.subr.bf16.mxu0 0
        %311 = vmatpush1.bf16.msra.mxu0 0
        %312 = vmatprep.subr.bf16.mxu0 0
        %313 = vmatpush1.bf16.msra.mxu0 0
        %314 = vmatprep.subr.bf16.mxu0 0
        %315 = vmatpush1.bf16.msra.mxu0 0
        %316 = vmatprep.subr.bf16.mxu0 0
        %317 = vmatpush1.bf16.msra.mxu0 0
        %318 = vmatprep.subr.bf16.mxu0 0
        %319 = vmatpush1.bf16.msra.mxu0 0
        %320 = vmatprep.subr.bf16.mxu0 0
        %321 = vmatpush1.bf16.msra.mxu0 0
        %322 = vmatprep.subr.bf16.mxu0 0
        %323 = vmatpush1.bf16.msra.mxu0 0
        %324 = vmatprep.subr.bf16.mxu0 0
        %325 = vmatpush1.bf16.msra.mxu0 0
        %326 = vmatprep.subr.bf16.mxu0 0
        %327 = vmatpush1.bf16.msra.mxu0 0
        %328 = vmatprep.subr.bf16.mxu0 0
        %329 = vmatpush1.bf16.msra.mxu0 0
        %330 = vmatprep.mubr.bf16.mxu0 0
        %331 = vmatmul.mubr.bf16.gmra.mrb[0].mxu0 %v296
        %v332 = vpop.f32.mrb[0].mxu0
        %v333 = vadd.f32 0.0, %v332
        %v334 = vpop.f32.mrb[0].mxu0
        %v335 = vpop.f32.mrb[0].mxu0
        %v336 = vpop.f32.mrb[0].mxu0
        %337 = vdwg.mxu0
        %v338 = vpack.c.bf16 %v333, %v333
        %s339 = sshra.s32 %s275, 3
        %s340 = sand.u32 %s275, 7
        %s341 = smul.addr %s339, 4
        %s342 = scalar_lea.vmem [#allocation2], %s341
        %vm343 = vcmask 125952
        %344 = vst.msk [vmem:[%s342] sm:$0xf] %vm343, %v338
        %v345 = vld [vmem:[#allocation10] sm:$0xf]
        %v346 = vld [vmem:[#allocation10 + $0x4] sm:$0xf]
        %v347 = vld [vmem:[#allocation10 + $0x8] sm:$0xf]
        %v348 = vld [vmem:[#allocation10 + $0xc] sm:$0xf]
        %v353 = vunpack.c.l.b16 %v345
        %v354 = vunpack.c.l.b16 %v346
        %v355 = vunpack.c.l.b16 %v347
        %v356 = vunpack.c.l.b16 %v348
        %v357 = vpack.c.b16 %v354, %v353
        %v358 = vpack.c.b16 %v356, %v355
        %361 = vmatprep.subr.bf16.mxu0 0
        %362 = vmatpush1.bf16.msra.mxu0 %v357
        %363 = vmatprep.subr.bf16.mxu0 0
        %364 = vmatpush1.bf16.msra.mxu0 %v358
        %365 = vmatprep.subr.bf16.mxu0 0
        %366 = vmatpush1.bf16.msra.mxu0 0
        %367 = vmatprep.subr.bf16.mxu0 0
        %368 = vmatpush1.bf16.msra.mxu0 0
        %369 = vmatprep.subr.bf16.mxu0 0
        %370 = vmatpush1.bf16.msra.mxu0 0
        %371 = vmatprep.subr.bf16.mxu0 0
        %372 = vmatpush1.bf16.msra.mxu0 0
        %373 = vmatprep.subr.bf16.mxu0 0
        %374 = vmatpush1.bf16.msra.mxu0 0
        %375 = vmatprep.subr.bf16.mxu0 0
        %376 = vmatpush1.bf16.msra.mxu0 0
        %377 = vmatprep.subr.bf16.mxu0 0
        %378 = vmatpush1.bf16.msra.mxu0 0
        %379 = vmatprep.subr.bf16.mxu0 0
        %380 = vmatpush1.bf16.msra.mxu0 0
        %381 = vmatprep.subr.bf16.mxu0 0
        %382 = vmatpush1.bf16.msra.mxu0 0
        %383 = vmatprep.subr.bf16.mxu0 0
        %384 = vmatpush1.bf16.msra.mxu0 0
        %385 = vmatprep.subr.bf16.mxu0 0
        %386 = vmatpush1.bf16.msra.mxu0 0
        %387 = vmatprep.subr.bf16.mxu0 0
        %388 = vmatpush1.bf16.msra.mxu0 0
        %389 = vmatprep.subr.bf16.mxu0 0
        %390 = vmatpush1.bf16.msra.mxu0 0
        %391 = vmatprep.subr.bf16.mxu0 0
        %392 = vmatpush1.bf16.msra.mxu0 0
        %393 = vmatprep.mubr.bf16.mxu0 0
        %394 = vmatmul.mubr.bf16.gmra.mrb[0].mxu0 %v296
        %v395 = vpop.f32.mrb[0].mxu0
        %v396 = vadd.f32 0.0, %v395
        %v397 = vpop.f32.mrb[0].mxu0
        %v398 = vpop.f32.mrb[0].mxu0
        %v399 = vpop.f32.mrb[0].mxu0
        %400 = vdwg.mxu0
        %v401 = vpack.c.bf16 %v396, %v396
        %s402 = smul.addr %s339, 4
        %s403 = scalar_lea.vmem [#allocation3], %s402
        %404 = vst.msk [vmem:[%s403] sm:$0xf] %vm343, %v401
        %v405 = vld [vmem:[#allocation7] sm:$0xf]
        %v406 = vld [vmem:[#allocation7 + $0x4] sm:$0xf]
        %v407 = vld [vmem:[#allocation7 + $0x8] sm:$0xf]
        %v408 = vld [vmem:[#allocation7 + $0xc] sm:$0xf]
        %v413 = vunpack.c.l.b16 %v405
        %v414 = vunpack.c.l.b16 %v406
        %v415 = vunpack.c.l.b16 %v407
        %v416 = vunpack.c.l.b16 %v408
        %v417 = vpack.c.b16 %v414, %v413
        %v418 = vpack.c.b16 %v416, %v415
        %421 = vmatprep.subr.bf16.mxu0 0
        %422 = vmatpush1.bf16.msra.mxu0 %v417
        %423 = vmatprep.subr.bf16.mxu0 0
        %424 = vmatpush1.bf16.msra.mxu0 %v418
        %425 = vmatprep.subr.bf16.mxu0 0
        %426 = vmatpush1.bf16.msra.mxu0 0
        %427 = vmatprep.subr.bf16.mxu0 0
        %428 = vmatpush1.bf16.msra.mxu0 0
        %429 = vmatprep.subr.bf16.mxu0 0
        %430 = vmatpush1.bf16.msra.mxu0 0
        %431 = vmatprep.subr.bf16.mxu0 0
        %432 = vmatpush1.bf16.msra.mxu0 0
        %433 = vmatprep.subr.bf16.mxu0 0
        %434 = vmatpush1.bf16.msra.mxu0 0
        %435 = vmatprep.subr.bf16.mxu0 0
        %436 = vmatpush1.bf16.msra.mxu0 0
        %437 = vmatprep.subr.bf16.mxu0 0
        %438 = vmatpush1.bf16.msra.mxu0 0
        %439 = vmatprep.subr.bf16.mxu0 0
        %440 = vmatpush1.bf16.msra.mxu0 0
        %441 = vmatprep.subr.bf16.mxu0 0
        %442 = vmatpush1.bf16.msra.mxu0 0
        %443 = vmatprep.subr.bf16.mxu0 0
        %444 = vmatpush1.bf16.msra.mxu0 0
        %445 = vmatprep.subr.bf16.mxu0 0
        %446 = vmatpush1.bf16.msra.mxu0 0
        %447 = vmatprep.subr.bf16.mxu0 0
        %448 = vmatpush1.bf16.msra.mxu0 0
        %449 = vmatprep.subr.bf16.mxu0 0
        %450 = vmatpush1.bf16.msra.mxu0 0
        %451 = vmatprep.subr.bf16.mxu0 0
        %452 = vmatpush1.bf16.msra.mxu0 0
        %453 = vmatprep.mubr.bf16.mxu0 0
        %454 = vmatmul.mubr.bf16.gmra.mrb[0].mxu0 %v296
        %v455 = vpop.f32.mrb[0].mxu0
        %v456 = vadd.f32 0.0, %v455
        %v457 = vpop.f32.mrb[0].mxu0
        %v458 = vpop.f32.mrb[0].mxu0
        %v459 = vpop.f32.mrb[0].mxu0
        %460 = vdwg.mxu0
        %v461 = vmul.f32 %v456, 0.25
        %v462 = vpack.c.bf16 %v461, %v461
        // While loop
        $region53: #{tpu_custom_call.1} parent=35 // loop_pre_header
          _
        $region54: #{tpu_custom_call.1} parent=35 // loop_header
          %s464 = sphi 0, %s466
          %p465 = scmp.ge.s32.totalorder %s464, %s28
          %v469 = vphi -1e+30, %v532
          %v470 = vphi 0.0, %v543
          %v471 = vphi 0.0, %v593
        $region55: #{tpu_custom_call.1} parent=35 // loop_header_branch
          %468 = sbr.rel (%p465) target = $region59
        $region56: #{tpu_custom_call.1} parent=35 // loop_body
          %s472 = smul.u32 %s464, 8
          %s473 = sshra.s32 %s472, 3
          %s474 = sand.u32 %s472, 7
          %s475 = smul.addr %s473, 4
          %s476 = scalar_lea.vmem [#allocation2], %s475
          %v477 = vld [vmem:[%s476] sm:$0xf]
          %s478 = smul.addr %s473, 4
          %s479 = scalar_lea.vmem [#allocation3], %s478
          %v480 = vld [vmem:[%s479] sm:$0xf]
          %vm481 = vcmask 130048
          %v483 = vsel %vm481, %v462, 0
          %v486 = vsel %vm481, %v477, 0
          %488 = vmatprep.subr.bf16.mxu0 0
          %489 = vmatpush1.bf16.xpose.msra.mxu0 %v486
          %490 = vmatprep.subr.bf16.mxu0 0
          %491 = vmatpush1.bf16.xpose.msra.mxu0 0
          %492 = vmatprep.subr.bf16.mxu0 0
          %493 = vmatpush1.bf16.xpose.msra.mxu0 0
          %494 = vmatprep.subr.bf16.mxu0 0
          %495 = vmatpush1.bf16.xpose.msra.mxu0 0
          %496 = vmatprep.subr.bf16.mxu0 0
          %497 = vmatpush1.bf16.xpose.msra.mxu0 0
          %498 = vmatprep.subr.bf16.mxu0 0
          %499 = vmatpush1.bf16.xpose.msra.mxu0 0
          %500 = vmatprep.subr.bf16.mxu0 0
          %501 = vmatpush1.bf16.xpose.msra.mxu0 0
          %502 = vmatprep.subr.bf16.mxu0 0
          %503 = vmatpush1.bf16.xpose.msra.mxu0 0
          %504 = vmatprep.subr.bf16.mxu0 0
          %505 = vmatpush1.bf16.xpose.msra.mxu0 0
          %506 = vmatprep.subr.bf16.mxu0 0
          %507 = vmatpush1.bf16.xpose.msra.mxu0 0
          %508 = vmatprep.subr.bf16.mxu0 0
          %509 = vmatpush1.bf16.xpose.msra.mxu0 0
          %510 = vmatprep.subr.bf16.mxu0 0
          %511 = vmatpush1.bf16.xpose.msra.mxu0 0
          %512 = vmatprep.subr.bf16.mxu0 0
          %513 = vmatpush1.bf16.xpose.msra.mxu0 0
          %514 = vmatprep.subr.bf16.mxu0 0
          %515 = vmatpush1.bf16.xpose.msra.mxu0 0
          %516 = vmatprep.subr.bf16.mxu0 0
          %517 = vmatpush1.bf16.xpose.msra.mxu0 0
          %518 = vmatprep.subr.bf16.mxu0 0
          %519 = vmatpush1.bf16.xpose.msra.mxu0 0
          %520 = vmatprep.mubr.bf16.mxu0 0
          %521 = vmatmul.mubr.bf16.gmra.mrb[0].mxu0 %v483
          %v522 = vpop.f32.mrb[0].mxu0
          %v523 = vadd.f32 0.0, %v522
          %v524 = vpop.f32.mrb[0].mxu0
          %v525 = vpop.f32.mrb[0].mxu0
          %v526 = vpop.f32.mrb[0].mxu0
          %527 = vdwg.mxu0
          %vm528 = vcmask 64512
          %v529 = vsel %vm528, %v523, -inf
          %530 = vmax.xlane.f32.xlu0 %v529
          %v531 = vpop.xlane.xlu0 %530
          %v532 = vmax.f32 %v469, %v531
          %v533 = vsub.f32 %v469, %v532
          %v534 = vmul.f32 %v533, 1.442695
          %v535 = vpow.pop %v534
          %v536 = vsub.f32 %v523, %v532
          %v537 = vmul.f32 %v536, 1.442695
          %v538 = vpow.pop %v537
          %v539 = vmul.f32 %v535, %v470
          %v540 = vsel %vm528, %v538, 0.0
          %541 = vadd.xlane.f32.xlu0 %v540
          %v542 = vpop.xlane.xlu0 %541
          %v543 = vadd.f32 %v539, %v542
          %v544 = vmul.f32 %v535, %v471
          %v545 = vpack.c.bf16 %v538, %v538
          %v547 = vsel %vm528, %v545, 0
          %vm549 = vcmask 1043456
          %v551 = vsel %vm549, %v480, 0
          %553 = vmatprep.subr.bf16.mxu0 0
          %554 = vmatpush1.bf16.msra.mxu0 %v551
          %555 = vmatprep.subr.bf16.mxu0 0
          %556 = vmatpush1.bf16.msra.mxu0 0
          %557 = vmatprep.subr.bf16.mxu0 0
          %558 = vmatpush1.bf16.msra.mxu0 0
          %559 = vmatprep.subr.bf16.mxu0 0
          %560 = vmatpush1.bf16.msra.mxu0 0
          %561 = vmatprep.subr.bf16.mxu0 0
          %562 = vmatpush1.bf16.msra.mxu0 0
          %563 = vmatprep.subr.bf16.mxu0 0
          %564 = vmatpush1.bf16.msra.mxu0 0
          %565 = vmatprep.subr.bf16.mxu0 0
          %566 = vmatpush1.bf16.msra.mxu0 0
          %567 = vmatprep.subr.bf16.mxu0 0
          %568 = vmatpush1.bf16.msra.mxu0 0
          %569 = vmatprep.subr.bf16.mxu0 0
          %570 = vmatpush1.bf16.msra.mxu0 0
          %571 = vmatprep.subr.bf16.mxu0 0
          %572 = vmatpush1.bf16.msra.mxu0 0
          %573 = vmatprep.subr.bf16.mxu0 0
          %574 = vmatpush1.bf16.msra.mxu0 0
          %575 = vmatprep.subr.bf16.mxu0 0
          %576 = vmatpush1.bf16.msra.mxu0 0
          %577 = vmatprep.subr.bf16.mxu0 0
          %578 = vmatpush1.bf16.msra.mxu0 0
          %579 = vmatprep.subr.bf16.mxu0 0
          %580 = vmatpush1.bf16.msra.mxu0 0
          %581 = vmatprep.subr.bf16.mxu0 0
          %582 = vmatpush1.bf16.msra.mxu0 0
          %583 = vmatprep.subr.bf16.mxu0 0
          %584 = vmatpush1.bf16.msra.mxu0 0
          %585 = vmatprep.mubr.bf16.mxu0 0
          %586 = vmatmul.mubr.bf16.gmra.mrb[0].mxu0 %v547
          %v587 = vpop.f32.mrb[0].mxu0
          %v588 = vadd.f32 0.0, %v587
          %v589 = vpop.f32.mrb[0].mxu0
          %v590 = vpop.f32.mrb[0].mxu0
          %v591 = vpop.f32.mrb[0].mxu0
          %592 = vdwg.mxu0
          %v593 = vadd.f32 %v544, %v588
        $region57: #{tpu_custom_call.1} parent=35 // loop_footer
          %s466 = sadd.s32 %s464, 1
        $region58: #{tpu_custom_call.1} parent=35 // loop_footer_branch
          %463 = sbr.rel target = $region54
        $region59: #{tpu_custom_call.1} parent=35 // loop_exit
          _
        %v594 = vld [vmem:[%s342] sm:$0xf]
        %v595 = vld [vmem:[%s403] sm:$0xf]
        %vm596 = vcmask 130048
        %v598 = vsel %vm596, %v462, 0
        %v601 = vsel %vm596, %v594, 0
        %603 = vmatprep.subr.bf16.mxu0 0
        %604 = vmatpush1.bf16.xpose.msra.mxu0 %v601
        %605 = vmatprep.subr.bf16.mxu0 0
        %606 = vmatpush1.bf16.xpose.msra.mxu0 0
        %607 = vmatprep.subr.bf16.mxu0 0
        %608 = vmatpush1.bf16.xpose.msra.mxu0 0
        %609 = vmatprep.subr.bf16.mxu0 0
        %610 = vmatpush1.bf16.xpose.msra.mxu0 0
        %611 = vmatprep.subr.bf16.mxu0 0
        %612 = vmatpush1.bf16.xpose.msra.mxu0 0
        %613 = vmatprep.subr.bf16.mxu0 0
        %614 = vmatpush1.bf16.xpose.msra.mxu0 0
        %615 = vmatprep.subr.bf16.mxu0 0
        %616 = vmatpush1.bf16.xpose.msra.mxu0 0
        %617 = vmatprep.subr.bf16.mxu0 0
        %618 = vmatpush1.bf16.xpose.msra.mxu0 0
        %619 = vmatprep.subr.bf16.mxu0 0
        %620 = vmatpush1.bf16.xpose.msra.mxu0 0
        %621 = vmatprep.subr.bf16.mxu0 0
        %622 = vmatpush1.bf16.xpose.msra.mxu0 0
        %623 = vmatprep.subr.bf16.mxu0 0
        %624 = vmatpush1.bf16.xpose.msra.mxu0 0
        %625 = vmatprep.subr.bf16.mxu0 0
        %626 = vmatpush1.bf16.xpose.msra.mxu0 0
        %627 = vmatprep.subr.bf16.mxu0 0
        %628 = vmatpush1.bf16.xpose.msra.mxu0 0
        %629 = vmatprep.subr.bf16.mxu0 0
        %630 = vmatpush1.bf16.xpose.msra.mxu0 0
        %631 = vmatprep.subr.bf16.mxu0 0
        %632 = vmatpush1.bf16.xpose.msra.mxu0 0
        %633 = vmatprep.subr.bf16.mxu0 0
        %634 = vmatpush1.bf16.xpose.msra.mxu0 0
        %635 = vmatprep.mubr.bf16.mxu0 0
        %636 = vmatmul.mubr.bf16.gmra.mrb[0].mxu0 %v598
        %v637 = vpop.f32.mrb[0].mxu0
        %v638 = vadd.f32 0.0, %v637
        %v639 = vpop.f32.mrb[0].mxu0
        %v640 = vpop.f32.mrb[0].mxu0
        %v641 = vpop.f32.mrb[0].mxu0
        %642 = vdwg.mxu0
        %v643 = vlaneseq
        %v644 = vshrl.u32 %v643, 7
        %v645 = vlaneseq
        %v646 = vand.u32 %v645, 127
        %vm647 = vcmp.le.s32.totalorder %v646, %v644
        %v648 = vsel %vm647, %v638, -1e+30
        %vm649 = vcmask 64512
        %v650 = vsel %vm649, %v648, -inf
        %651 = vmax.xlane.f32.xlu0 %v650
        %v652 = vpop.xlane.xlu0 %651
        %v653 = vmax.f32 %v469, %v652
        %v654 = vsub.f32 %v469, %v653
        %v655 = vmul.f32 %v654, 1.442695
        %v656 = vpow.pop %v655
        %v657 = vsub.f32 %v648, %v653
        %v658 = vmul.f32 %v657, 1.442695
        %v659 = vpow.pop %v658
        %v660 = vmul.f32 %v656, %v470
        %v661 = vsel %vm649, %v659, 0.0
        %662 = vadd.xlane.f32.xlu0 %v661
        %v663 = vpop.xlane.xlu0 %662
        %v664 = vadd.f32 %v660, %v663
        %v665 = vmul.f32 %v656, %v471
        %v666 = vpack.c.bf16 %v659, %v659
        %v668 = vsel %vm649, %v666, 0
        %vm670 = vcmask 1043456
        %v672 = vsel %vm670, %v595, 0
        %674 = vmatprep.subr.bf16.mxu0 0
        %675 = vmatpush1.bf16.msra.mxu0 %v672
        %676 = vmatprep.subr.bf16.mxu0 0
        %677 = vmatpush1.bf16.msra.mxu0 0
        %678 = vmatprep.subr.bf16.mxu0 0
        %679 = vmatpush1.bf16.msra.mxu0 0
        %680 = vmatprep.subr.bf16.mxu0 0
        %681 = vmatpush1.bf16.msra.mxu0 0
        %682 = vmatprep.subr.bf16.mxu0 0
        %683 = vmatpush1.bf16.msra.mxu0 0
        %684 = vmatprep.subr.bf16.mxu0 0
        %685 = vmatpush1.bf16.msra.mxu0 0
        %686 = vmatprep.subr.bf16.mxu0 0
        %687 = vmatpush1.bf16.msra.mxu0 0
        %688 = vmatprep.subr.bf16.mxu0 0
        %689 = vmatpush1.bf16.msra.mxu0 0
        %690 = vmatprep.subr.bf16.mxu0 0
        %691 = vmatpush1.bf16.msra.mxu0 0
        %692 = vmatprep.subr.bf16.mxu0 0
        %693 = vmatpush1.bf16.msra.mxu0 0
        %694 = vmatprep.subr.bf16.mxu0 0
        %695 = vmatpush1.bf16.msra.mxu0 0
        %696 = vmatprep.subr.bf16.mxu0 0
        %697 = vmatpush1.bf16.msra.mxu0 0
        %698 = vmatprep.subr.bf16.mxu0 0
        %699 = vmatpush1.bf16.msra.mxu0 0
        %700 = vmatprep.subr.bf16.mxu0 0
        %701 = vmatpush1.bf16.msra.mxu0 0
        %702 = vmatprep.subr.bf16.mxu0 0
        %703 = vmatpush1.bf16.msra.mxu0 0
        %704 = vmatprep.subr.bf16.mxu0 0
        %705 = vmatpush1.bf16.msra.mxu0 0
        %706 = vmatprep.mubr.bf16.mxu0 0
        %707 = vmatmul.mubr.bf16.gmra.mrb[0].mxu0 %v668
        %v708 = vpop.f32.mrb[0].mxu0
        %v709 = vadd.f32 0.0, %v708
        %v710 = vpop.f32.mrb[0].mxu0
        %v711 = vpop.f32.mrb[0].mxu0
        %v712 = vpop.f32.mrb[0].mxu0
        %713 = vdwg.mxu0
        %v714 = vadd.f32 %v665, %v709
        %v715 = vrcp.pop %v664
        %v716 = vmul.f32 %v714, %v715
        %717 = vst.msk [vmem:[%s273] sm:$0xff] %vm596, %v716
        %s718 = sand.u32 %s136, 1
        %s719 = scalar_lea.sflag [#allocation6], %s718
        %s720 = sand.u32 %s136, 1
        %s721 = smul.addr %s720, 8
        %s722 = scalar_lea.vmem [#allocation12], %s721
        // Predicated region
        $region60: #{tpu_custom_call.1} parent=35 // pred_check
          %p723 = pneg %p146
        $region61: #{tpu_custom_call.1} parent=35 // pred_check_branch
          %725 = sbr.rel (%p723) target = $region63
        $region62: #{tpu_custom_call.1} parent=35 // pred_region
          %s727 = ssub.s32 128, 128
          %728 = vsyncadd %s719, %s727
          %s729 = sadd.s32 %s28, %s27
          %s730 = smul.addr %s729, 128
          %s731 = scalar_lea.hbm %s4, %s730
          %s733 = sshll.u32 %s722, 4
          %s734 = int_to_ptr.vmem [resolvable:$true] %s733
          %736 = dma.vmem_to_hbm [thread:$0]  %s734, 128, %s731, %s719
        $region63: #{tpu_custom_call.1} parent=35 // pred_fallthru
          _
      $region36: #{tpu_custom_call.1} parent=5 // pred_fallthru
        _
      %p737 = scmp.le.s32.totalorder 2, %s18
      // Predicated region
      $region64: #{tpu_custom_call.1} parent=5 // pred_check
        %p738 = pneg %p737
      $region65: #{tpu_custom_call.1} parent=5 // pred_check_branch
        %740 = sbr.rel (%p738) target = $region67
      $region66: #{tpu_custom_call.1} parent=5 // pred_region
        %s741 = ssub.s32 %s18, 2
        // Predicated region
        $region68: #{tpu_custom_call.1} parent=66 // pred_check
          %p742 = pneg %p152
        $region69: #{tpu_custom_call.1} parent=66 // pred_check_branch
          %744 = sbr.rel (%p742) target = $region71
        $region70: #{tpu_custom_call.1} parent=66 // pred_region
          %s745 = sand.u32 %s137, 1
          %s746 = scalar_lea.sflag [#allocation6], %s745
          %s747 = sand.u32 %s137, 1
          %s748 = smul.addr %s747, 8
          %s749 = scalar_lea.vmem [#allocation12], %s748
          %750 = dma.done %s746, 128
        $region71: #{tpu_custom_call.1} parent=66 // pred_fallthru
          _
      $region67: #{tpu_custom_call.1} parent=5 // pred_fallthru
        _
    $region6: #{tpu_custom_call.1} parent=1 // loop_footer
      %s22 = sadd.s32 1, %s18
    $region7: #{tpu_custom_call.1} parent=1 // loop_footer_branch
      %17 = sbr.rel target = $region3
    $region8: #{tpu_custom_call.1} parent=1 // loop_exit
      _
    %751 = vsyncpa [#allocation5], 1
    %s752 = scalar_lea.sflag [#allocation5], 1
    %753 = vsyncpa %s752, 1
    %754 = vsyncpa [#allocation8], 1
    %755 = vsyncpa [#allocation11], 1
    %756 = vsyncpa [#allocation6], 1
    %s757 = scalar_lea.sflag [#allocation6], 1
    %758 = vsyncpa %s757, 1

</llo_original>
